<compile_context>
chip_gen: v7x
topology: tpu7x:2x2x1
jax: 0.10.0
libtpu: 0.0.40
codegen_flags: <defaults>
</compile_context>

<pallas_src>
import jax
import jax.numpy as jnp
from jax.experimental import pallas as pl
from jax.experimental.pallas import tpu as pltpu


def _round_up(x, m):
    return ((x + m - 1) // m) * m


def _cdiv(a, b):
    return (a + b - 1) // b


def _vmem_capacity_bytes():
    try:
        cap = int(pltpu.get_tpu_info().vmem_capacity_bytes)
        if cap > 0:
            return cap
    except Exception:
        pass
    return 64 << 20  # conservative fallback: v7x per-TC VMEM


def _choose_tiles(m_rows, k, e_pad, x_item, w_item, out_item, budget):
    """Pick (TM, TE) so double-buffered x/out tiles plus the double-buffered
    (K, TE) weight block fit the VMEM budget."""
    # E tile: keep the (K, TE) weight (2 buffers: Pallas double-buffers every
    # input, even invariant ones) within half the budget; fall back to E tiling
    # for embed dims too large to hold resident (e.g. K=E=4096 f32 on v7x).
    te = e_pad
    if 2 * k * te * w_item > budget // 2:
        te = (budget // 2) // max(2 * k * w_item, 1)
        te = max(128, (te // 128) * 128)
        te = min(te, e_pad)

    resident = 2 * k * te * w_item + 2 * te * out_item  # weight + bias buffers
    avail = max(budget - resident, 0)
    per_row = 2 * (k * x_item + te * out_item)          # double-buffered x + out rows
    tm = max(avail // max(per_row, 1), 8)
    tm = min(tm, _round_up(m_rows, 8))                  # don't over-allocate tiny M
    if tm >= 256:
        tm = (tm // 256) * 256                          # full 2x256^2 MXU fill (v6e/v7x)
    elif tm >= 128:
        tm = (tm // 128) * 128
    else:
        tm = max(8, (tm // 8) * 8)                      # (8,128) sublane constraint

    # Ensure >= 2 grid steps when possible so the v7x megacore can shard.
    if _cdiv(m_rows, tm) * _cdiv(e_pad, te) == 1 and m_rows > 8:
        tm = max(8, _round_up(_cdiv(m_rows, 2), 8))
    return tm, te


def _make_embed_kernel(matmul_dtype):
    def kernel(x_ref, w_ref, b_ref, o_ref):
        # x_ref: (TM, K), w_ref: (K, TE), b_ref: (1, TE), o_ref: (TM, TE)
        x = x_ref[...]
        w = w_ref[...]
        if matmul_dtype is not None:
            x = x.astype(matmul_dtype)   # bf16 MXU path; weight already cast in wrapper
            w = w.astype(matmul_dtype)
        acc = jnp.dot(x, w, preferred_element_type=jnp.float32)
        o_ref[...] = (acc + b_ref[...].astype(jnp.float32)).astype(o_ref.dtype)
    return kernel


def input1d_to_embeddings(x, weight, bias, *, segment_size, matmul_dtype=None):
    """Forward pass of Input1dToEmbeddings.

    x:      (B, seq_len, in_channels)
    weight: (K, E) with K = segment_size * in_channels.
            NOTE: PyTorch nn.Linear stores weight as (E, K); pass its transpose.
    bias:   (E,)
    Returns (B, seq_len // segment_size, E).
    """
    B, seq_len, in_channels = x.shape
    assert seq_len % segment_size == 0
    L = seq_len // segment_size
    K = segment_size * in_channels
    assert weight.shape[0] == K, "weight must be (K, E): transpose the PyTorch nn.Linear weight"
    E = weight.shape[1]
    assert bias.shape == (E,)

    out_dtype = x.dtype
    x_item = jnp.dtype(x.dtype).itemsize
    if matmul_dtype is not None:
        weight = weight.astype(matmul_dtype)   # one-time cast of the small weight
    w_item = jnp.dtype(weight.dtype).itemsize
    out_item = jnp.dtype(out_dtype).itemsize
    b_item = jnp.dtype(bias.dtype).itemsize

    # 'b (h2 h1) c -> b h2 (h1 c)' + batch flatten == contiguous reshape (free).
    M = B * L
    x2d = x.reshape(M, K)

    # Lane-dense output: pad only E (no-op for 128-aligned embed dims).
    E_pad = _round_up(E, 128)
    if E_pad != E:
        weight = jnp.pad(weight, ((0, 0), (0, E_pad - E)))
        bias = jnp.pad(bias, (0, E_pad - E))
    b2d = bias.reshape(1, E_pad)

    cap = _vmem_capacity_bytes()
    budget = int(cap * 0.7)                    # headroom for Mosaic internal scratch
    TM, TE = _choose_tiles(M, K, E_pad, x_item, w_item, out_item, budget)

    ne = _cdiv(E_pad, TE)
    nm = _cdiv(M, TM)          # ragged final M tile is clipped by Pallas: no pad / slice
    grid = (ne, nm)            # E outermost -> weight block DMA'd only `ne` times

    vmem_need = (2 * K * TE * w_item           # weight (double-buffered)
                 + 2 * TE * b_item             # bias   (double-buffered)
                 + 2 * TM * (K * x_item + TE * out_item))
    vmem_limit = int(min(cap * 0.9, max(vmem_need + (8 << 20), 16 << 20)))

    out2d = pl.pallas_call(
        _make_embed_kernel(matmul_dtype),
        out_shape=jax.ShapeDtypeStruct((M, E_pad), out_dtype),
        grid_spec=pl.GridSpec(
            grid=grid,
            in_specs=[
                pl.BlockSpec((TM, K), lambda j, i: (i, 0)),    # x tile (pipelined over M)
                pl.BlockSpec((K, TE), lambda j, i: (0, j)),    # weight tile (constant over inner M loop)
                pl.BlockSpec((1, TE), lambda j, i: (0, j)),    # bias tile
            ],
            out_specs=pl.BlockSpec((TM, TE), lambda j, i: (i, j)),
        ),
        compiler_params=pltpu.CompilerParams(
            dimension_semantics=("parallel", "parallel"),      # megacore sharding on v7x
            vmem_limit_bytes=vmem_limit,
        ),
        cost_estimate=pl.CostEstimate(
            flops=2 * M * K * E_pad,
            transcendentals=0,
            bytes_accessed=(ne * M * K * x_item + K * E_pad * w_item
                            + E_pad * b_item + M * E_pad * out_item),
        ),
    )(x2d, weight, b2d)

    if E_pad != E:
        out2d = out2d[:, :E]
    return out2d.reshape(B, L, E)


if __name__ == "__main__":
    key = jax.random.PRNGKey(0)

    # --- Test 1: module-consistent small shapes (E needs lane padding) ---------
    seq_len, segment_size, in_channels, embed_dim, batch = 16, 4, 8, 32, 2
    K = segment_size * in_channels
    kx, kw, kb, key = *jax.random.split(key, 3), jax.random.split(key, 4)[3]

    x = jax.random.normal(kx, (batch, seq_len, in_channels), dtype=jnp.float32)
    bound = 1.0 / (K ** 0.5)
    # Synthetic nn.Linear(K, embed_dim) params stored as (K, E) (torch weight transposed).
    weight = jax.random.uniform(kw, (K, embed_dim), minval=-bound, maxval=bound,
                                dtype=jnp.float32)
    bias = jax.random.uniform(kb, (embed_dim,), minval=-bound, maxval=bound,
                              dtype=jnp.float32)

    out = input1d_to_embeddings(x, weight, bias, segment_size=segment_size)
    out = jax.block_until_ready(out)
    ref = x.reshape(batch, seq_len // segment_size, K) @ weight + bias
    assert out.shape == (batch, seq_len // segment_size, embed_dim)
    assert jnp.allclose(out, ref, atol=1e-5, rtol=1e-5)

    # --- Test 2: ragged M tiles + 128-aligned E (no padding / no slice path) ---
    seq_len2, segment_size2, in_channels2, embed_dim2, batch2 = 24, 4, 8, 128, 3
    K2 = segment_size2 * in_channels2
    kx2, kw2, kb2 = jax.random.split(key, 3)
    x2 = jax.random.normal(kx2, (batch2, seq_len2, in_channels2), dtype=jnp.float32)
    bound2 = 1.0 / (K2 ** 0.5)
    weight2 = jax.random.uniform(kw2, (K2, embed_dim2), minval=-bound2, maxval=bound2,
                                 dtype=jnp.float32)
    bias2 = jax.random.uniform(kb2, (embed_dim2,), minval=-bound2, maxval=bound2,
                               dtype=jnp.float32)

    out2 = input1d_to_embeddings(x2, weight2, bias2, segment_size=segment_size2)
    out2 = jax.block_until_ready(out2)
    ref2 = x2.reshape(batch2, seq_len2 // segment_size2, K2) @ weight2 + bias2
    assert out2.shape == (batch2, seq_len2 // segment_size2, embed_dim2)
    assert jnp.allclose(out2, ref2, atol=1e-5, rtol=1e-5)

    print("KERNEL_OK")
</pallas_src>

<mosaic_0001>
module attributes {stable_mosaic.version = 11 : i64} {
  func.func @kernel(%arg0: i32, %arg1: i32, %arg2: memref<8x32xf32, #tpu.memory_space<vmem>>, %arg3: memref<32x128xf32, #tpu.memory_space<vmem>>, %arg4: memref<1x128xf32, #tpu.memory_space<vmem>>, %arg5: memref<8x128xf32, #tpu.memory_space<vmem>>) attributes {dimension_semantics = [#tpu.dimension_semantics<parallel>, #tpu.dimension_semantics<parallel>], iteration_bounds = array<i64: 1, 1>, scalar_prefetch = 0 : i64, scratch_operands = 0 : i64, tpu.core_type = #tpu.core_type<tc>, window_params = [{transform_indices = @transform_0, window_bounds = array<i64: 8, 32>}, {transform_indices = @transform_1, window_bounds = array<i64: 32, 128>}, {transform_indices = @transform_2, window_bounds = array<i64: 1, 128>}, {transform_indices = @transform_3, window_bounds = array<i64: 8, 128>}]} {
    %c0 = arith.constant 0 : index
    %c0_0 = arith.constant 0 : index
    %0 = vector.load %arg2[%c0, %c0_0] : memref<8x32xf32, #tpu.memory_space<vmem>>, vector<8x32xf32>
    %c0_1 = arith.constant 0 : index
    %c0_2 = arith.constant 0 : index
    %1 = vector.load %arg3[%c0_1, %c0_2] : memref<32x128xf32, #tpu.memory_space<vmem>>, vector<32x128xf32>
    %cst = arith.constant dense<0.000000e+00> : vector<8x128xf32>
    %2 = tpu.matmul %0, %1, %cst {dimension_numbers = #tpu.dot_dimension_numbers<[1], [0], [0], [1], [0, 0, 1, 1], [], []>} : vector<8x32xf32>, vector<32x128xf32>, vector<8x128xf32> -> vector<8x128xf32>
    %c0_3 = arith.constant 0 : index
    %c0_4 = arith.constant 0 : index
    %3 = vector.load %arg4[%c0_3, %c0_4] : memref<1x128xf32, #tpu.memory_space<vmem>>, vector<1x128xf32>
    %4 = vector.broadcast %3 : vector<1x128xf32> to vector<8x128xf32>
    %5 = arith.addf %2, %4 : vector<8x128xf32>
    %c0_5 = arith.constant 0 : index
    %c0_6 = arith.constant 0 : index
    %6 = vector.load %arg5[%c0_5, %c0_6] : memref<8x128xf32, #tpu.memory_space<vmem>>, vector<8x128xf32>
    tpu.vector_store %arg5[%c0_5, %c0_6], %5 {strides = array<i32>} : memref<8x128xf32, #tpu.memory_space<vmem>>, vector<8x128xf32>,
    return
  }
  func.func @transform_0(%arg0: i32, %arg1: i32) -> (i32, i32) {
    %c0_i32 = arith.constant 0 : i32
    %c0_i32_0 = arith.constant 0 : i32
    return %arg1, %c0_i32 : i32, i32
  }
  func.func @transform_1(%arg0: i32, %arg1: i32) -> (i32, i32) {
    %c0_i32 = arith.constant 0 : i32
    %c0_i32_0 = arith.constant 0 : i32
    return %c0_i32, %arg0 : i32, i32
  }
  func.func @transform_2(%arg0: i32, %arg1: i32) -> (i32, i32) {
    %c0_i32 = arith.constant 0 : i32
    %c0_i32_0 = arith.constant 0 : i32
    return %c0_i32, %arg0 : i32, i32
  }
  func.func @transform_3(%arg0: i32, %arg1: i32) -> (i32, i32) {
    %c0_i32 = arith.constant 0 : i32
    return %arg1, %arg0 : i32, i32
  }
}

</mosaic_0001>

<llo_original>
// kernel: tpu_custom_call.1
$region0: #{tpu_custom_call.1}
  #allocation0 [shape = 'u32[]', space=smem, size = 0x4, offset = 0x4, fixed_abs, tag = 'smem constant byte address 0x4 - core index']
  #allocation1 [shape = 'u32[144,128]{1,0:T(1,128)}', space=vmem, size = 0x12000, scoped, tag = 'internal scratch']
  %s0 = inlined_call_operand.hbm [shape: f32[8,32], index: 0, kind: input, shape index: {}]
  %s1 = inlined_call_operand.hbm [shape: f32[32,128], index: 1, kind: input, shape index: {}]
  %s2 = inlined_call_operand.vmem [shape: f32[1,128], index: 2, kind: input, shape index: {}]
  %s3 = inlined_call_operand.hbm [shape: f32[8,128], index: 3, kind: output, shape index: {}]
  %s4 = sld [smem:[#allocation0]]
  $region30: #{tpu_custom_call.1} parent=0
    _
  %s6 = ssub.s32 1, %s4
  %s7 = scalar_select 0, %s6, %s4
  $region1: #{tpu_custom_call.1} parent=0
    #allocation2 [shape = 'u8[4096]{0}', space=vmem, size = 0x1000, scoped, tag = 'input window, operand 0, single buffered']
    #allocation3 [shape = 's32[1]{0}', space=sflag, size = 0x4, scoped, tag = 'scoped memory for tpu_custom_call.1']
    #allocation4 [shape = 's32[1]{0}', space=sflag, size = 0x4, scoped, tag = 'scoped memory for tpu_custom_call.1']
    #allocation5 [shape = 'u8[16384]{0}', space=vmem, size = 0x4000, scoped, tag = 'input window, operand 1, single buffered']
    #allocation6 [shape = 's32[1]{0}', space=sflag, size = 0x4, scoped, tag = 'scoped memory for tpu_custom_call.1']
    #allocation7 [shape = 'u8[4096]{0}', space=vmem, size = 0x1000, scoped, tag = 'output window, operand 0, single buffered']
    %8 = vsyncpa [#allocation3], 0
    %9 = vsyncpa [#allocation6], 0
    %10 = vsyncpa [#allocation4], 0
    // Predicated region
    $region2: #{tpu_custom_call.1} parent=1 // pred_check
      _
    $region3: #{tpu_custom_call.1} parent=1 // pred_check_branch
      %12 = sbr.rel (0) target = $region5
    $region4: #{tpu_custom_call.1} parent=1 // pred_region
      %s14 = ssub.s32 128, 128
      %15 = vsyncadd [#allocation3], %s14
      %s17 = sshll.u32 [#allocation2], 4
      %s18 = int_to_ptr.vmem [resolvable:$true] %s17
      %20 = dma.hbm_to_vmem [thread:$0]  %s0, 128, %s18, [#allocation3]
    $region5: #{tpu_custom_call.1} parent=1 // pred_fallthru
      _
    // Predicated region
    $region6: #{tpu_custom_call.1} parent=1 // pred_check
      _
    $region7: #{tpu_custom_call.1} parent=1 // pred_check_branch
      %22 = sbr.rel (0) target = $region9
    $region8: #{tpu_custom_call.1} parent=1 // pred_region
      %s24 = ssub.s32 512, 512
      %25 = vsyncadd [#allocation6], %s24
      %s26 = sshll.u32 [#allocation5], 4
      %s27 = int_to_ptr.vmem [resolvable:$true] %s26
      %32 = dma.hbm_to_vmem [thread:$0]  %s1, 512, %s27, [#allocation6], 128, 128, 8
    $region9: #{tpu_custom_call.1} parent=1 // pred_fallthru
      _
    // Predicated region
    $region10: #{tpu_custom_call.1} parent=1 // pred_check
      _
    $region11: #{tpu_custom_call.1} parent=1 // pred_check_branch
      %34 = sbr.rel (0) target = $region13
    $region12: #{tpu_custom_call.1} parent=1 // pred_region
      _
    $region13: #{tpu_custom_call.1} parent=1 // pred_fallthru
      _
    // Predicated region
    $region14: #{tpu_custom_call.1} parent=1 // pred_check
      _
    $region15: #{tpu_custom_call.1} parent=1 // pred_check_branch
      %36 = sbr.rel (0) target = $region17
    $region16: #{tpu_custom_call.1} parent=1 // pred_region
      %37 = dma.done [#allocation3], 128
    $region17: #{tpu_custom_call.1} parent=1 // pred_fallthru
      _
    // Predicated region
    $region18: #{tpu_custom_call.1} parent=1 // pred_check
      _
    $region19: #{tpu_custom_call.1} parent=1 // pred_check_branch
      %39 = sbr.rel (0) target = $region21
    $region20: #{tpu_custom_call.1} parent=1 // pred_region
      %40 = dma.done [#allocation6], 512
    $region21: #{tpu_custom_call.1} parent=1 // pred_fallthru
      _
    %v41 = vld [vmem:[#allocation2] sm:$0xff]
    %v42 = vld [vmem:[#allocation5] sm:$0xff]
    %v43 = vld [vmem:[#allocation5 + $0x8] sm:$0xff]
    %v44 = vld [vmem:[#allocation5 + $0x10] sm:$0xff]
    %v45 = vld [vmem:[#allocation5 + $0x18] sm:$0xff]
    %v46 = vld [vmem:[%s2] sm:$0x1]
    %v48 = vlaneseq
    %v49 = vshrl.u32 %v48, 7
    %v50 = vsub.s32 0, %v49
    %v51 = vrot.slane %v46, %v50
    %vm53 = vcmask 261120
    %v55 = vsel %vm53, %v41, 0
    %57 = vmatprep.subr.mxu0 0.0
    %58 = vmatpush1.msra.mxu0 %v42
    %59 = vmatprep.subr.mxu0 0.0
    %60 = vmatpush1.msra.mxu0 %v43
    %61 = vmatprep.subr.mxu0 0.0
    %62 = vmatpush1.msra.mxu0 %v44
    %63 = vmatprep.subr.mxu0 0.0
    %64 = vmatpush1.msra.mxu0 %v45
    %65 = vmatprep.subr.mxu0 0.0
    %66 = vmatpush1.msra.mxu0 0.0
    %67 = vmatprep.subr.mxu0 0.0
    %68 = vmatpush1.msra.mxu0 0.0
    %69 = vmatprep.subr.mxu0 0.0
    %70 = vmatpush1.msra.mxu0 0.0
    %71 = vmatprep.subr.mxu0 0.0
    %72 = vmatpush1.msra.mxu0 0.0
    %73 = vmatprep.subr.mxu0 0.0
    %74 = vmatpush1.msra.mxu0 0.0
    %75 = vmatprep.subr.mxu0 0.0
    %76 = vmatpush1.msra.mxu0 0.0
    %77 = vmatprep.subr.mxu0 0.0
    %78 = vmatpush1.msra.mxu0 0.0
    %79 = vmatprep.subr.mxu0 0.0
    %80 = vmatpush1.msra.mxu0 0.0
    %81 = vmatprep.subr.mxu0 0.0
    %82 = vmatpush1.msra.mxu0 0.0
    %83 = vmatprep.subr.mxu0 0.0
    %84 = vmatpush1.msra.mxu0 0.0
    %85 = vmatprep.subr.mxu0 0.0
    %86 = vmatpush1.msra.mxu0 0.0
    %87 = vmatprep.subr.mxu0 0.0
    %88 = vmatpush1.msra.mxu0 0.0
    %89 = vmatprep.subr.mxu0 0.0
    %90 = vmatpush1.msra.mxu0 0.0
    %91 = vmatprep.subr.mxu0 0.0
    %92 = vmatpush1.msra.mxu0 0.0
    %93 = vmatprep.subr.mxu0 0.0
    %94 = vmatpush1.msra.mxu0 0.0
    %95 = vmatprep.subr.mxu0 0.0
    %96 = vmatpush1.msra.mxu0 0.0
    %97 = vmatprep.subr.mxu0 0.0
    %98 = vmatpush1.msra.mxu0 0.0
    %99 = vmatprep.subr.mxu0 0.0
    %100 = vmatpush1.msra.mxu0 0.0
    %101 = vmatprep.subr.mxu0 0.0
    %102 = vmatpush1.msra.mxu0 0.0
    %103 = vmatprep.subr.mxu0 0.0
    %104 = vmatpush1.msra.mxu0 0.0
    %105 = vmatprep.subr.mxu0 0.0
    %106 = vmatpush1.msra.mxu0 0.0
    %107 = vmatprep.subr.mxu0 0.0
    %108 = vmatpush1.msra.mxu0 0.0
    %109 = vmatprep.subr.mxu0 0.0
    %110 = vmatpush1.msra.mxu0 0.0
    %111 = vmatprep.subr.mxu0 0.0
    %112 = vmatpush1.msra.mxu0 0.0
    %113 = vmatprep.subr.mxu0 0.0
    %114 = vmatpush1.msra.mxu0 0.0
    %115 = vmatprep.subr.mxu0 0.0
    %116 = vmatpush1.msra.mxu0 0.0
    %117 = vmatprep.subr.mxu0 0.0
    %118 = vmatpush1.msra.mxu0 0.0
    %119 = vmatprep.subr.mxu0 0.0
    %120 = vmatpush1.msra.mxu0 0.0
    %121 = vmatprep.mubr.f32.mxu0 0.0
    %122 = vmatmul.mubr.f32.gmra.mrb[0].mxu0 %v55
    %v123 = vpop.f32.mrb[0].mxu0
    %v124 = vadd.f32 %v51, %v123
    %v125 = vpop.f32.mrb[0].mxu0
    %126 = vdwg.mxu0
    %127 = vst [vmem:[#allocation7] sm:$0xff] %v124
    // Predicated region
    $region22: #{tpu_custom_call.1} parent=1 // pred_check
      _
    $region23: #{tpu_custom_call.1} parent=1 // pred_check_branch
      %129 = sbr.rel (0) target = $region25
    $region24: #{tpu_custom_call.1} parent=1 // pred_region
      %s131 = ssub.s32 128, 128
      %132 = vsyncadd [#allocation4], %s131
      %s134 = sshll.u32 [#allocation7], 4
      %s135 = int_to_ptr.vmem [resolvable:$true] %s134
      %137 = dma.vmem_to_hbm [thread:$0]  %s135, 128, %s3, [#allocation4]
    $region25: #{tpu_custom_call.1} parent=1 // pred_fallthru
      _
    // Predicated region
    $region26: #{tpu_custom_call.1} parent=1 // pred_check
      _
    $region27: #{tpu_custom_call.1} parent=1 // pred_check_branch
      %139 = sbr.rel (0) target = $region29
    $region28: #{tpu_custom_call.1} parent=1 // pred_region
      %140 = dma.done [#allocation4], 128
    $region29: #{tpu_custom_call.1} parent=1 // pred_fallthru
      _
    %141 = vsyncpa [#allocation3], 1
    %142 = vsyncpa [#allocation6], 1
    %143 = vsyncpa [#allocation4], 1

</llo_original>
